<compile_context>
chip_gen: v6e
topology: v6e:2x2x1
jax: 0.10.0
libtpu: 0.0.40
codegen_flags: <defaults>
</compile_context>

<pallas_src>
import functools

import jax
import jax.numpy as jnp
from jax.experimental import pallas as pl
from jax.experimental.pallas import tpu as pltpu


def _cdiv(a: int, b: int) -> int:
    return -(-a // b)


def _round_up(n: int, m: int) -> int:
    return ((n + m - 1) // m) * m


def _sublane_multiple(itemsize: int) -> int:
    # Sub-32-bit dtypes pack along sublanes: f32 -> 8, bf16 -> 16, int8 -> 32.
    return 8 * max(1, 4 // max(1, itemsize))


@functools.lru_cache(maxsize=1)
def _chip_config():
    """Generation-aware (tile budget, vmem limit, #TensorCores)."""
    vmem = None
    try:
        info = pltpu.get_tpu_info()
        vmem = int(getattr(info, "vmem_capacity_bytes", 0)) or None
    except Exception:
        vmem = None
    if vmem is None:
        # Conservative defaults that are safe on every generation.
        return {
            "tile_bytes": 2 * 1024 * 1024,
            "vmem_limit": 40 * 1024 * 1024,
            "num_cores": 2,
        }
    if vmem <= 80 * 1024 * 1024:
        # v7x-class: ~64 MiB VMEM per TensorCore, 2 TCs, 3.2 TB/s HBM.
        # 4 MiB tiles: 2x(in)+2x(out) double buffers + ~3 f32 temporaries
        # ~= 28 MiB, comfortably under the 48 MiB limit / 64 MiB physical.
        return {
            "tile_bytes": 4 * 1024 * 1024,
            "vmem_limit": 48 * 1024 * 1024,
            "num_cores": 2,
        }
    # v5e / v6e-class: 128 MiB VMEM, single TensorCore.
    return {
        "tile_bytes": 6 * 1024 * 1024,
        "vmem_limit": 80 * 1024 * 1024,
        "num_cores": 1,
    }


def _min_grid_steps(cfg, total_padded_bytes: int) -> int:
    """Minimum grid steps so multi-TC chips get >=2 steps/core on non-tiny arrays."""
    cores = cfg["num_cores"]
    if cores <= 1:
        return 1  # single TC: a forced split only adds pipeline overhead
    if total_padded_bytes >= 2 * 1024 * 1024:
        return 2 * cores  # enough work per core to overlap DMA with compute
    if total_padded_bytes >= 256 * 1024:
        return cores
    return 1


def _softmax_last_kernel(x_ref, o_ref):
    # x_ref / o_ref: (block_rows, D) VMEM tiles; softmax along the last (lane) axis.
    x = x_ref[...].astype(jnp.float32)
    m = jnp.max(x, axis=-1, keepdims=True)
    e = jnp.exp(x - m)
    s = jnp.sum(e, axis=-1, keepdims=True)
    # Exact reciprocal: one per row, keeps the 1e-5 tolerance.
    o_ref[...] = (e * pl.reciprocal(s, approx=False)).astype(o_ref.dtype)


def _softmax_mid_kernel(x_ref, o_ref):
    # x_ref / o_ref: (block_pre, D, block_cols) VMEM tiles; softmax along axis=1.
    # D sits on sublanes, trailing columns on lanes -> lane-dense loads/stores.
    x = x_ref[...].astype(jnp.float32)
    m = jnp.max(x, axis=1, keepdims=True)
    e = jnp.exp(x - m)
    s = jnp.sum(e, axis=1, keepdims=True)
    o_ref[...] = (e * pl.reciprocal(s, approx=False)).astype(o_ref.dtype)


def _softmax_last(x2d: jax.Array) -> jax.Array:
    """Softmax over the last axis of a 2D [rows, D] array (D kept untiled)."""
    cfg = _chip_config()
    rows, d = x2d.shape
    itemsize = jnp.dtype(x2d.dtype).itemsize
    sub = _sublane_multiple(itemsize)
    tile_bytes = cfg["tile_bytes"]

    # Physical (padded) VMEM bytes per row of the tile: lanes pad to 128.
    padded_row_bytes = _round_up(d, 128) * itemsize

    if rows <= sub:
        # Full-extent leading block (no sublane-multiple requirement needed).
        block_rows = rows
    else:
        budget_rows = max(sub, (tile_bytes // padded_row_bytes) // sub * sub)
        block_rows = min(budget_rows, _round_up(rows, sub))

        # Multi-TC chips: ensure enough grid steps on non-tiny arrays.
        total_padded = _round_up(rows, sub) * padded_row_bytes
        min_steps = _min_grid_steps(cfg, total_padded)
        if min_steps > 1:
            target = max(sub, _round_up(_cdiv(rows, min_steps), sub))
            block_rows = min(block_rows, target)

    n = rows * d
    grid = (_cdiv(rows, block_rows),)
    return pl.pallas_call(
        _softmax_last_kernel,
        out_shape=jax.ShapeDtypeStruct((rows, d), x2d.dtype),
        grid_spec=pltpu.PrefetchScalarGridSpec(
            num_scalar_prefetch=0,
            grid=grid,
            in_specs=[pl.BlockSpec((block_rows, d), lambda i: (i, 0))],
            out_specs=pl.BlockSpec((block_rows, d), lambda i: (i, 0)),
        ),
        compiler_params=pltpu.CompilerParams(
            dimension_semantics=("parallel",),
            vmem_limit_bytes=cfg["vmem_limit"],
        ),
        cost_estimate=pl.CostEstimate(
            flops=5 * n,
            transcendentals=n,
            bytes_accessed=2 * n * itemsize,
        ),
    )(x2d)


def _softmax_mid(x3d: jax.Array) -> jax.Array:
    """Softmax over the middle axis of a 3D [pre, D, post] array (D kept untiled)."""
    cfg = _chip_config()
    pre, d, post = x3d.shape
    itemsize = jnp.dtype(x3d.dtype).itemsize
    sub = _sublane_multiple(itemsize)
    tile_bytes = cfg["tile_bytes"]

    d_padded = _round_up(d, sub)

    # Lane (last) dim of the block: multiple of 128, or the full extent if small.
    if post <= 128:
        block_cols = post
    else:
        budget_cols = max(
            128, (tile_bytes // max(1, d_padded * itemsize)) // 128 * 128
        )
        block_cols = min(budget_cols, _round_up(post, 128))

    # Leading dim: soak up the remaining tile budget using PADDED slab bytes.
    padded_slab_bytes = max(1, d_padded * _round_up(block_cols, 128) * itemsize)
    block_pre = max(1, min(pre, tile_bytes // padded_slab_bytes))

    # Multi-TC chips: ensure enough grid steps on non-tiny arrays.
    total_padded = pre * d_padded * _round_up(post, 128) * itemsize
    min_steps = _min_grid_steps(cfg, total_padded)
    cols_steps = _cdiv(post, block_cols)
    if min_steps > 1 and _cdiv(pre, block_pre) * cols_steps < min_steps and pre > 1:
        need_pre = max(1, _cdiv(min_steps, cols_steps))
        block_pre = max(1, min(block_pre, _cdiv(pre, need_pre)))

    n = pre * d * post
    grid = (_cdiv(pre, block_pre), _cdiv(post, block_cols))
    return pl.pallas_call(
        _softmax_mid_kernel,
        out_shape=jax.ShapeDtypeStruct((pre, d, post), x3d.dtype),
        grid_spec=pltpu.PrefetchScalarGridSpec(
            num_scalar_prefetch=0,
            grid=grid,
            in_specs=[
                pl.BlockSpec((block_pre, d, block_cols), lambda i, j: (i, 0, j))
            ],
            out_specs=pl.BlockSpec(
                (block_pre, d, block_cols), lambda i, j: (i, 0, j)
            ),
        ),
        compiler_params=pltpu.CompilerParams(
            dimension_semantics=("parallel", "parallel"),
            vmem_limit_bytes=cfg["vmem_limit"],
        ),
        cost_estimate=pl.CostEstimate(
            flops=5 * n,
            transcendentals=n,
            bytes_accessed=2 * n * itemsize,
        ),
    )(x3d)


@functools.partial(jax.jit, static_argnames=("dim",))
def softmax(x: jax.Array, dim: int = -1) -> jax.Array:
    """Equivalent of torch.nn.Softmax(dim=dim)(x) for arbitrary-rank float input."""
    ndim = x.ndim
    axis = dim % ndim
    shape = x.shape
    d = shape[axis]
    pre = 1
    for s in shape[:axis]:
        pre *= s
    post = 1
    for s in shape[axis + 1:]:
        post *= s

    if post == 1:
        # Softmax axis is (effectively) the last axis: free reshape, lane reduce.
        y = _softmax_last(x.reshape(pre, d))
    else:
        # Interior axis: free reshape to [pre, D, post]; reduce over sublanes and
        # keep `post` on lanes (no moveaxis / transpose round trip through HBM).
        y = _softmax_mid(x.reshape(pre, d, post))
    return y.reshape(shape)


if __name__ == "__main__":
    key = jax.random.PRNGKey(0)

    # Default module config: Softmax(dim=-1). Small shape consistent with tests.
    x = jax.random.normal(key, (2, 4, 16, 16), dtype=jnp.float32)
    y = softmax(x, dim=-1)
    jax.block_until_ready(y)
    assert jnp.allclose(y, jax.nn.softmax(x, axis=-1), atol=1e-5, rtol=1e-5)

    # Mirror the other test_data configurations (non-last dims, ragged sizes).
    checks = [
        ((1, 5, 8, 7), -3),    # randn_neg_dim
        ((1, 10, 8, 10), -2),  # rand_neg_dim
        ((1, 8, 5, 2), 0),     # zeros (dim=0)
        ((1, 7, 8, 9), -4),    # zeros_neg_dim
        ((10, 10), 1),         # ones
        ((1, 2, 5, 8), 2),     # rand
        ((2, 10, 10, 10), 3),  # randn_mult_batches
        ((1, 3, 4), -1),       # ones_neg_dim
    ]
    for i, (shape, dim) in enumerate(checks):
        xi = jax.random.normal(jax.random.PRNGKey(i + 1), shape, dtype=jnp.float32)
        yi = softmax(xi, dim=dim)
        jax.block_until_ready(yi)
        assert jnp.allclose(
            yi, jax.nn.softmax(xi, axis=dim), atol=1e-5, rtol=1e-5
        ), (shape, dim)

    print("KERNEL_OK")
</pallas_src>

<mosaic_0001>
module attributes {stable_mosaic.version = 11 : i64} {
  func.func @_softmax_last_kernel(%arg0: i32, %arg1: memref<128x16xf32, #tpu.memory_space<vmem>>, %arg2: memref<128x16xf32, #tpu.memory_space<vmem>>) attributes {dimension_semantics = [#tpu.dimension_semantics<parallel>], iteration_bounds = array<i64: 1>, scalar_prefetch = 0 : i64, scratch_operands = 0 : i64, tpu.core_type = #tpu.core_type<tc>, window_params = [{transform_indices = @transform_0, window_bounds = array<i64: 128, 16>}, {transform_indices = @transform_1, window_bounds = array<i64: 128, 16>}]} {
    %c0 = arith.constant 0 : index
    %c0_0 = arith.constant 0 : index
    %0 = vector.load %arg1[%c0, %c0_0] : memref<128x16xf32, #tpu.memory_space<vmem>>, vector<128x16xf32>
    %cst = arith.constant dense<0xFF800000> : vector<128xf32>
    %1 = vector.multi_reduction <maximumf>, %0, %cst [1] : vector<128x16xf32> to vector<128xf32>
    %2 = vector.shape_cast %1 : vector<128xf32> to vector<128x1xf32>
    %3 = vector.broadcast %2 : vector<128x1xf32> to vector<128x16xf32>
    %4 = arith.subf %0, %3 : vector<128x16xf32>
    %5 = math.exp %4 : vector<128x16xf32>
    %cst_1 = arith.constant dense<0.000000e+00> : vector<128xf32>
    %6 = vector.multi_reduction <add>, %5, %cst_1 [1] : vector<128x16xf32> to vector<128xf32>
    %7 = vector.shape_cast %6 : vector<128xf32> to vector<128x1xf32>
    %8 = tpu.reciprocal %7 : vector<128x1xf32> -> vector<128x1xf32>
    %9 = vector.broadcast %8 : vector<128x1xf32> to vector<128x16xf32>
    %10 = arith.mulf %5, %9 : vector<128x16xf32>
    %c0_2 = arith.constant 0 : index
    %c0_3 = arith.constant 0 : index
    %11 = vector.load %arg2[%c0_2, %c0_3] : memref<128x16xf32, #tpu.memory_space<vmem>>, vector<128x16xf32>
    tpu.vector_store %arg2[%c0_2, %c0_3], %10 {strides = array<i32>} : memref<128x16xf32, #tpu.memory_space<vmem>>, vector<128x16xf32>,
    return
  }
  func.func @transform_0(%arg0: i32) -> (i32, i32) {
    %c0_i32 = arith.constant 0 : i32
    %c0_i32_0 = arith.constant 0 : i32
    return %arg0, %c0_i32 : i32, i32
  }
  func.func @transform_1(%arg0: i32) -> (i32, i32) {
    %c0_i32 = arith.constant 0 : i32
    %c0_i32_0 = arith.constant 0 : i32
    return %arg0, %c0_i32 : i32, i32
  }
}

</mosaic_0001>

<llo_original>
// kernel: softmax.1
$region0: #{softmax.1}
  #allocation0 [shape = 'u32[]', space=smem, size = 0x4, offset = 0x4, fixed_abs, tag = 'smem constant byte address 0x4 - core index']
  #allocation1 [shape = 'u32[144,128]{1,0:T(1,128)}', space=vmem, size = 0x12000, scoped, tag = 'internal scratch']
  %s0 = inlined_call_operand.hbm [shape: f32[128,16], index: 0, kind: input, shape index: {}]
  %s1 = inlined_call_operand.hbm [shape: f32[128,16], index: 1, kind: output, shape index: {}]
  %s2 = sld [smem:[#allocation0]]
  $region18: #{softmax.1} parent=0
    _
  %s4 = ssub.s32 1, %s2
  %s5 = scalar_select 0, %s4, %s2
  $region1: #{softmax.1} parent=0
    #allocation2 [shape = 'u8[65536]{0}', space=vmem, size = 0x10000, scoped, tag = 'input window, operand 0, single buffered']
    #allocation3 [shape = 's32[1]{0}', space=sflag, size = 0x4, scoped, tag = 'scoped memory for softmax.1']
    #allocation4 [shape = 's32[1]{0}', space=sflag, size = 0x4, scoped, tag = 'scoped memory for softmax.1']
    #allocation5 [shape = 'u8[65536]{0}', space=vmem, size = 0x10000, scoped, tag = 'output window, operand 0, single buffered']
    %6 = vsyncpa [#allocation3], 0
    %7 = vsyncpa [#allocation4], 0
    // Predicated region
    $region2: #{softmax.1} parent=1 // pred_check
      _
    $region3: #{softmax.1} parent=1 // pred_check_branch
      %9 = sbr.rel (0) target = $region5
    $region4: #{softmax.1} parent=1 // pred_region
      %s11 = ssub.s32 2048, 2048
      %12 = vsyncadd [#allocation3], %s11
      %s13 = sshll.u32 [#allocation2], 4
      %s14 = int_to_ptr.vmem [resolvable:$true] %s13
      %19 = dma.hbm_to_vmem [thread:$0]  %s0, 2048, %s14, [#allocation3], 128, 128, 8
    $region5: #{softmax.1} parent=1 // pred_fallthru
      _
    // Predicated region
    $region6: #{softmax.1} parent=1 // pred_check
      _
    $region7: #{softmax.1} parent=1 // pred_check_branch
      %21 = sbr.rel (0) target = $region9
    $region8: #{softmax.1} parent=1 // pred_region
      %22 = dma.done [#allocation3], 2048
    $region9: #{softmax.1} parent=1 // pred_fallthru
      _
    %v23 = vld [vmem:[#allocation2] sm:$0xff]
    %v24 = vld [vmem:[#allocation2 + $0x8] sm:$0xff]
    %v25 = vld [vmem:[#allocation2 + $0x10] sm:$0xff]
    %v26 = vld [vmem:[#allocation2 + $0x18] sm:$0xff]
    %v27 = vld [vmem:[#allocation2 + $0x20] sm:$0xff]
    %v28 = vld [vmem:[#allocation2 + $0x28] sm:$0xff]
    %v29 = vld [vmem:[#allocation2 + $0x30] sm:$0xff]
    %v30 = vld [vmem:[#allocation2 + $0x38] sm:$0xff]
    %v31 = vld [vmem:[#allocation2 + $0x40] sm:$0xff]
    %v32 = vld [vmem:[#allocation2 + $0x48] sm:$0xff]
    %v33 = vld [vmem:[#allocation2 + $0x50] sm:$0xff]
    %v34 = vld [vmem:[#allocation2 + $0x58] sm:$0xff]
    %v35 = vld [vmem:[#allocation2 + $0x60] sm:$0xff]
    %v36 = vld [vmem:[#allocation2 + $0x68] sm:$0xff]
    %v37 = vld [vmem:[#allocation2 + $0x70] sm:$0xff]
    %v38 = vld [vmem:[#allocation2 + $0x78] sm:$0xff]
    %vm39 = vcmask 130048
    %v40 = vsel %vm39, %v23, -inf
    %41 = vmax.xlane.f32.xlu0 %v40
    %v42 = vpop.xlane.xlu0 %41
    %v43 = vsel %vm39, %v24, -inf
    %44 = vmax.xlane.f32.xlu0 %v43
    %v45 = vpop.xlane.xlu0 %44
    %v46 = vsel %vm39, %v25, -inf
    %47 = vmax.xlane.f32.xlu0 %v46
    %v48 = vpop.xlane.xlu0 %47
    %v49 = vsel %vm39, %v26, -inf
    %50 = vmax.xlane.f32.xlu0 %v49
    %v51 = vpop.xlane.xlu0 %50
    %v52 = vsel %vm39, %v27, -inf
    %53 = vmax.xlane.f32.xlu0 %v52
    %v54 = vpop.xlane.xlu0 %53
    %v55 = vsel %vm39, %v28, -inf
    %56 = vmax.xlane.f32.xlu0 %v55
    %v57 = vpop.xlane.xlu0 %56
    %v58 = vsel %vm39, %v29, -inf
    %59 = vmax.xlane.f32.xlu0 %v58
    %v60 = vpop.xlane.xlu0 %59
    %v61 = vsel %vm39, %v30, -inf
    %62 = vmax.xlane.f32.xlu0 %v61
    %v63 = vpop.xlane.xlu0 %62
    %v64 = vsel %vm39, %v31, -inf
    %65 = vmax.xlane.f32.xlu0 %v64
    %v66 = vpop.xlane.xlu0 %65
    %v67 = vsel %vm39, %v32, -inf
    %68 = vmax.xlane.f32.xlu0 %v67
    %v69 = vpop.xlane.xlu0 %68
    %v70 = vsel %vm39, %v33, -inf
    %71 = vmax.xlane.f32.xlu0 %v70
    %v72 = vpop.xlane.xlu0 %71
    %v73 = vsel %vm39, %v34, -inf
    %74 = vmax.xlane.f32.xlu0 %v73
    %v75 = vpop.xlane.xlu0 %74
    %v76 = vsel %vm39, %v35, -inf
    %77 = vmax.xlane.f32.xlu0 %v76
    %v78 = vpop.xlane.xlu0 %77
    %v79 = vsel %vm39, %v36, -inf
    %80 = vmax.xlane.f32.xlu0 %v79
    %v81 = vpop.xlane.xlu0 %80
    %v82 = vsel %vm39, %v37, -inf
    %83 = vmax.xlane.f32.xlu0 %v82
    %v84 = vpop.xlane.xlu0 %83
    %v85 = vsel %vm39, %v38, -inf
    %86 = vmax.xlane.f32.xlu0 %v85
    %v87 = vpop.xlane.xlu0 %86
    %v88 = vsub.f32 %v23, %v42
    %v89 = vsub.f32 %v24, %v45
    %v90 = vsub.f32 %v25, %v48
    %v91 = vsub.f32 %v26, %v51
    %v92 = vsub.f32 %v27, %v54
    %v93 = vsub.f32 %v28, %v57
    %v94 = vsub.f32 %v29, %v60
    %v95 = vsub.f32 %v30, %v63
    %v96 = vsub.f32 %v31, %v66
    %v97 = vsub.f32 %v32, %v69
    %v98 = vsub.f32 %v33, %v72
    %v99 = vsub.f32 %v34, %v75
    %v100 = vsub.f32 %v35, %v78
    %v101 = vsub.f32 %v36, %v81
    %v102 = vsub.f32 %v37, %v84
    %v103 = vsub.f32 %v38, %v87
    %v104 = vmul.f32 %v88, 1.442695
    %v105 = vpow.pop %v104
    %v106 = vmul.f32 %v89, 1.442695
    %v107 = vpow.pop %v106
    %v108 = vmul.f32 %v90, 1.442695
    %v109 = vpow.pop %v108
    %v110 = vmul.f32 %v91, 1.442695
    %v111 = vpow.pop %v110
    %v112 = vmul.f32 %v92, 1.442695
    %v113 = vpow.pop %v112
    %v114 = vmul.f32 %v93, 1.442695
    %v115 = vpow.pop %v114
    %v116 = vmul.f32 %v94, 1.442695
    %v117 = vpow.pop %v116
    %v118 = vmul.f32 %v95, 1.442695
    %v119 = vpow.pop %v118
    %v120 = vmul.f32 %v96, 1.442695
    %v121 = vpow.pop %v120
    %v122 = vmul.f32 %v97, 1.442695
    %v123 = vpow.pop %v122
    %v124 = vmul.f32 %v98, 1.442695
    %v125 = vpow.pop %v124
    %v126 = vmul.f32 %v99, 1.442695
    %v127 = vpow.pop %v126
    %v128 = vmul.f32 %v100, 1.442695
    %v129 = vpow.pop %v128
    %v130 = vmul.f32 %v101, 1.442695
    %v131 = vpow.pop %v130
    %v132 = vmul.f32 %v102, 1.442695
    %v133 = vpow.pop %v132
    %v134 = vmul.f32 %v103, 1.442695
    %v135 = vpow.pop %v134
    %v136 = vsel %vm39, %v105, 0.0
    %137 = vadd.xlane.f32.xlu0 %v136
    %v138 = vpop.xlane.xlu0 %137
    %v139 = vsel %vm39, %v107, 0.0
    %140 = vadd.xlane.f32.xlu0 %v139
    %v141 = vpop.xlane.xlu0 %140
    %v142 = vsel %vm39, %v109, 0.0
    %143 = vadd.xlane.f32.xlu0 %v142
    %v144 = vpop.xlane.xlu0 %143
    %v145 = vsel %vm39, %v111, 0.0
    %146 = vadd.xlane.f32.xlu0 %v145
    %v147 = vpop.xlane.xlu0 %146
    %v148 = vsel %vm39, %v113, 0.0
    %149 = vadd.xlane.f32.xlu0 %v148
    %v150 = vpop.xlane.xlu0 %149
    %v151 = vsel %vm39, %v115, 0.0
    %152 = vadd.xlane.f32.xlu0 %v151
    %v153 = vpop.xlane.xlu0 %152
    %v154 = vsel %vm39, %v117, 0.0
    %155 = vadd.xlane.f32.xlu0 %v154
    %v156 = vpop.xlane.xlu0 %155
    %v157 = vsel %vm39, %v119, 0.0
    %158 = vadd.xlane.f32.xlu0 %v157
    %v159 = vpop.xlane.xlu0 %158
    %v160 = vsel %vm39, %v121, 0.0
    %161 = vadd.xlane.f32.xlu0 %v160
    %v162 = vpop.xlane.xlu0 %161
    %v163 = vsel %vm39, %v123, 0.0
    %164 = vadd.xlane.f32.xlu0 %v163
    %v165 = vpop.xlane.xlu0 %164
    %v166 = vsel %vm39, %v125, 0.0
    %167 = vadd.xlane.f32.xlu0 %v166
    %v168 = vpop.xlane.xlu0 %167
    %v169 = vsel %vm39, %v127, 0.0
    %170 = vadd.xlane.f32.xlu0 %v169
    %v171 = vpop.xlane.xlu0 %170
    %v172 = vsel %vm39, %v129, 0.0
    %173 = vadd.xlane.f32.xlu0 %v172
    %v174 = vpop.xlane.xlu0 %173
    %v175 = vsel %vm39, %v131, 0.0
    %176 = vadd.xlane.f32.xlu0 %v175
    %v177 = vpop.xlane.xlu0 %176
    %v178 = vsel %vm39, %v133, 0.0
    %179 = vadd.xlane.f32.xlu0 %v178
    %v180 = vpop.xlane.xlu0 %179
    %v181 = vsel %vm39, %v135, 0.0
    %182 = vadd.xlane.f32.xlu0 %v181
    %v183 = vpop.xlane.xlu0 %182
    %v184 = vrcp.pop %v138
    %v185 = vrcp.pop %v141
    %v186 = vrcp.pop %v144
    %v187 = vrcp.pop %v147
    %v188 = vrcp.pop %v150
    %v189 = vrcp.pop %v153
    %v190 = vrcp.pop %v156
    %v191 = vrcp.pop %v159
    %v192 = vrcp.pop %v162
    %v193 = vrcp.pop %v165
    %v194 = vrcp.pop %v168
    %v195 = vrcp.pop %v171
    %v196 = vrcp.pop %v174
    %v197 = vrcp.pop %v177
    %v198 = vrcp.pop %v180
    %v199 = vrcp.pop %v183
    %v200 = vmul.f32 %v105, %v184
    %v201 = vmul.f32 %v107, %v185
    %v202 = vmul.f32 %v109, %v186
    %v203 = vmul.f32 %v111, %v187
    %v204 = vmul.f32 %v113, %v188
    %v205 = vmul.f32 %v115, %v189
    %v206 = vmul.f32 %v117, %v190
    %v207 = vmul.f32 %v119, %v191
    %v208 = vmul.f32 %v121, %v192
    %v209 = vmul.f32 %v123, %v193
    %v210 = vmul.f32 %v125, %v194
    %v211 = vmul.f32 %v127, %v195
    %v212 = vmul.f32 %v129, %v196
    %v213 = vmul.f32 %v131, %v197
    %v214 = vmul.f32 %v133, %v198
    %v215 = vmul.f32 %v135, %v199
    %216 = vst.msk [vmem:[#allocation5] sm:$0xff] %vm39, %v200
    %217 = vst.msk [vmem:[#allocation5 + $0x8] sm:$0xff] %vm39, %v201
    %218 = vst.msk [vmem:[#allocation5 + $0x10] sm:$0xff] %vm39, %v202
    %219 = vst.msk [vmem:[#allocation5 + $0x18] sm:$0xff] %vm39, %v203
    %220 = vst.msk [vmem:[#allocation5 + $0x20] sm:$0xff] %vm39, %v204
    %221 = vst.msk [vmem:[#allocation5 + $0x28] sm:$0xff] %vm39, %v205
    %222 = vst.msk [vmem:[#allocation5 + $0x30] sm:$0xff] %vm39, %v206
    %223 = vst.msk [vmem:[#allocation5 + $0x38] sm:$0xff] %vm39, %v207
    %224 = vst.msk [vmem:[#allocation5 + $0x40] sm:$0xff] %vm39, %v208
    %225 = vst.msk [vmem:[#allocation5 + $0x48] sm:$0xff] %vm39, %v209
    %226 = vst.msk [vmem:[#allocation5 + $0x50] sm:$0xff] %vm39, %v210
    %227 = vst.msk [vmem:[#allocation5 + $0x58] sm:$0xff] %vm39, %v211
    %228 = vst.msk [vmem:[#allocation5 + $0x60] sm:$0xff] %vm39, %v212
    %229 = vst.msk [vmem:[#allocation5 + $0x68] sm:$0xff] %vm39, %v213
    %230 = vst.msk [vmem:[#allocation5 + $0x70] sm:$0xff] %vm39, %v214
    %231 = vst.msk [vmem:[#allocation5 + $0x78] sm:$0xff] %vm39, %v215
    // Predicated region
    $region10: #{softmax.1} parent=1 // pred_check
      _
    $region11: #{softmax.1} parent=1 // pred_check_branch
      %233 = sbr.rel (0) target = $region13
    $region12: #{softmax.1} parent=1 // pred_region
      %s235 = ssub.s32 2048, 2048
      %236 = vsyncadd [#allocation4], %s235
      %s237 = sshll.u32 [#allocation5], 4
      %s238 = int_to_ptr.vmem [resolvable:$true] %s237
      %243 = dma.vmem_to_hbm [thread:$0]  %s238, 2048, %s1, [#allocation4], 128, 128, 8
    $region13: #{softmax.1} parent=1 // pred_fallthru
      _
    // Predicated region
    $region14: #{softmax.1} parent=1 // pred_check
      _
    $region15: #{softmax.1} parent=1 // pred_check_branch
      %245 = sbr.rel (0) target = $region17
    $region16: #{softmax.1} parent=1 // pred_region
      %246 = dma.done [#allocation4], 2048
    $region17: #{softmax.1} parent=1 // pred_fallthru
      _
    %247 = vsyncpa [#allocation3], 1
    %248 = vsyncpa [#allocation4], 1

</llo_original>
